<compile_context>
chip_gen: v7x
topology: tpu7x:2x2x1
jax: 0.10.0
libtpu: 0.0.40
codegen_flags: <defaults>
</compile_context>

<pallas_src>
import jax
import jax.numpy as jnp
from jax.experimental import pallas as pl
from jax.experimental.pallas import tpu as pltpu


def _round_up(x, m):
    return (x + m - 1) // m * m


def _pick_tile(dim, align, cap):
    """Largest multiple of `align` that divides round_up(dim, align) and is <= cap."""
    padded = _round_up(dim, align)
    cap = max(align, min(cap, padded))
    best = align
    t = align
    while t <= cap:
        if padded % t == 0:
            best = t
        t += align
    return best


def _vmem_limit_bytes():
    """Generation-aware scoped-VMEM request (leave headroom for compiler scratch)."""
    cap = 64 * 1024 * 1024  # conservative fallback (v7x physical VMEM per TC)
    try:
        info = pltpu.get_tpu_info()
        c = getattr(info, "vmem_capacity_bytes", None)
        if c:
            cap = int(c)
    except Exception:
        pass
    # 3/4 of physical, capped at 96 MiB: ~48 MiB on v7x, ~96 MiB on v5e/v6e.
    return max(32 * 1024 * 1024, min(cap * 3 // 4, 96 * 1024 * 1024))


# ----------------------- small path: no grid, VMEM-resident -----------------------
def _linear_kernel_small(x_ref, w_ref, b_ref, o_ref):
    # x_ref: (B, K), w_ref: (K, N), b_ref: (1, N) — whole arrays resident in VMEM.
    acc = jnp.dot(x_ref[...], w_ref[...], preferred_element_type=jnp.float32)
    o_ref[...] = (acc + b_ref[...]).astype(o_ref.dtype)


# --------------- tiled path, float32 output: accumulate into o_ref ----------------
def _linear_kernel_tiled_accout(x_ref, w_ref, b_ref, o_ref):
    # o_ref's index_map ignores k -> the block stays resident in VMEM across the
    # K (last, "arbitrary") grid axis, so it doubles as the f32 accumulator.
    @pl.when(pl.program_id(2) == 0)
    def _():
        o_ref[...] = jnp.broadcast_to(b_ref[...], o_ref.shape)  # bias added once

    o_ref[...] += jnp.dot(x_ref[...], w_ref[...],
                          preferred_element_type=jnp.float32)


# --------------- tiled path, non-f32 output: f32 scratch accumulator --------------
def _linear_kernel_tiled_scratch(x_ref, w_ref, b_ref, o_ref, acc_ref):
    k = pl.program_id(2)

    @pl.when(k == 0)
    def _():
        acc_ref[...] = jnp.broadcast_to(b_ref[...], acc_ref.shape)  # bias once

    acc_ref[...] += jnp.dot(x_ref[...], w_ref[...],
                            preferred_element_type=jnp.float32)

    @pl.when(k == pl.num_programs(2) - 1)
    def _():
        o_ref[...] = acc_ref[...].astype(o_ref.dtype)


def linear_probe_forward(x, w, b, *, tm=512, tn=512, tk=512, tiled=None,
                         compute_dtype=jnp.bfloat16):
    """y = x @ w + b  with w of shape (in_dim, out_dim), b of shape (out_dim,)."""
    B, K = x.shape
    Kw, N = w.shape
    assert Kw == K and b.shape == (N,)

    if tiled is None:
        # Rough f32-equivalent VMEM estimate; tiny probes skip grid machinery.
        total_bytes = (x.size + w.size + B * N) * 4
        tiled = total_bytes > (4 * 1024 * 1024)

    # ---------------- small path: everything resident, no pads, no grid -----------
    if not tiled:
        return pl.pallas_call(
            _linear_kernel_small,
            out_shape=jax.ShapeDtypeStruct((B, N), x.dtype),
            in_specs=[pl.BlockSpec(memory_space=pltpu.MemorySpace.VMEM)] * 3,
            out_specs=pl.BlockSpec(memory_space=pltpu.MemorySpace.VMEM),
        )(x, w, b.reshape(1, N))

    # ---------------- tiled path (real batches / wide features) -------------------
    out_dtype = x.dtype
    cd = jnp.dtype(compute_dtype if compute_dtype is not None else x.dtype)
    # bf16 operands pack 2 rows/sublane -> M blocks must be multiples of 16.
    m_align = max(8, 32 // cd.itemsize)

    # Tile sizes: divisors of the rounded extents (no all-zero blocks).
    tk_ = _pick_tile(K, 128, tk)
    tn_ = _pick_tile(N, 128, tn)
    tm_ = _pick_tile(B, m_align, tm)

    grid_m = pl.cdiv(B, tm_)
    grid_n = pl.cdiv(N, tn_)
    # Keep >=2 parallel tiles so v7x's two TensorCores both get work
    # (costs one extra ~0.35us grid step on single-core chips; negligible).
    if grid_m * grid_n < 2:
        if _round_up(N, 128) // 128 >= 2:
            tn_ = _pick_tile(N, 128, tn_ - 128)
            grid_n = pl.cdiv(N, tn_)
        elif _round_up(B, m_align) // m_align >= 2:
            tm_ = _pick_tile(B, m_align, tm_ - m_align)
            grid_m = pl.cdiv(B, tm_)

    # Cast operands to the MXU-friendly compute dtype (f32 accumulation kept).
    xc = x.astype(cd) if x.dtype != cd else x
    wc = w.astype(cd) if w.dtype != cd else w

    # Only K padding is correctness-critical (zeros contribute 0 to the dot);
    # M/N edge blocks are handled by Pallas read/write masking.
    Kp = _round_up(K, 128)
    if Kp != K:
        xc = jnp.pad(xc, ((0, 0), (0, Kp - K)))
        wc = jnp.pad(wc, ((0, Kp - K), (0, 0)))
    grid_k = Kp // tk_

    b2d = b.astype(jnp.float32).reshape(1, N)

    use_direct = out_dtype == jnp.float32
    kernel = _linear_kernel_tiled_accout if use_direct else _linear_kernel_tiled_scratch
    scratch = () if use_direct else (pltpu.VMEM((tm_, tn_), jnp.float32),)

    # TODO(synk): if profiling shows exposed DMA when HBM-bound, try
    # pipeline_mode=pl.Buffered(3) on the w BlockSpec below.
    return pl.pallas_call(
        kernel,
        out_shape=jax.ShapeDtypeStruct((B, N), out_dtype),
        grid_spec=pltpu.PrefetchScalarGridSpec(
            num_scalar_prefetch=0,
            grid=(grid_m, grid_n, grid_k),
            in_specs=[
                pl.BlockSpec((tm_, tk_), lambda i, j, k: (i, k)),
                pl.BlockSpec((tk_, tn_), lambda i, j, k: (k, j)),
                pl.BlockSpec((1, tn_), lambda i, j, k: (0, j)),
            ],
            out_specs=pl.BlockSpec((tm_, tn_), lambda i, j, k: (i, j)),
            scratch_shapes=scratch,
        ),
        compiler_params=pltpu.CompilerParams(
            dimension_semantics=("parallel", "parallel", "arbitrary"),
            vmem_limit_bytes=_vmem_limit_bytes(),
        ),
    )(xc, wc, b2d)


def init_linear_params(key, in_dim, out_dim, dtype=jnp.float32):
    # Deterministic init matching nn.Linear's uniform(-1/sqrt(in), 1/sqrt(in)).
    kw, kb = jax.random.split(key)
    bound = 1.0 / (in_dim ** 0.5)
    w = jax.random.uniform(kw, (in_dim, out_dim), dtype, -bound, bound)
    b = jax.random.uniform(kb, (out_dim,), dtype, -bound, bound)
    return w, b


if __name__ == "__main__":
    key = jax.random.PRNGKey(0)
    kx, kp, kx2, kp2, kx3, kp3 = jax.random.split(key, 6)

    # 1) Small probe matching the module spec (B=8, in_dim=32, out_dim=16)
    #    -> no-grid, whole-array-in-VMEM path (f32, exact).
    B, in_dim, out_dim = 8, 32, 16
    x = jax.random.normal(kx, (B, in_dim), jnp.float32)
    w, b = init_linear_params(kp, in_dim, out_dim)
    y = linear_probe_forward(x, w, b)
    jax.block_until_ready(y)
    y_ref = x @ w + b
    assert y.shape == (B, out_dim)
    assert jnp.allclose(y, y_ref, atol=1e-5, rtol=1e-5)

    # 2) Larger probe -> tiled bf16 path with divisor tiles (tk=384, no padding)
    #    and the 2-TensorCore parallel split (tn 256 -> 128).
    B2, in2, out2 = 512, 384, 256
    x2 = jax.random.normal(kx2, (B2, in2), jnp.float32)
    w2, b2 = init_linear_params(kp2, in2, out2)
    y2 = linear_probe_forward(x2, w2, b2, tiled=True)
    jax.block_until_ready(y2)
    y2_ref = jnp.dot(x2.astype(jnp.bfloat16), w2.astype(jnp.bfloat16),
                     preferred_element_type=jnp.float32) + b2
    assert y2.shape == (B2, out2)
    assert jnp.allclose(y2, y2_ref, atol=2e-2, rtol=2e-2)

    # 3) Unaligned K (=200) -> exercises the K-only zero-pad branch (tk=256).
    B3, in3, out3 = 256, 200, 256
    x3 = jax.random.normal(kx3, (B3, in3), jnp.float32)
    w3, b3 = init_linear_params(kp3, in3, out3)
    y3 = linear_probe_forward(x3, w3, b3, tiled=True)
    jax.block_until_ready(y3)
    y3_ref = jnp.dot(x3.astype(jnp.bfloat16), w3.astype(jnp.bfloat16),
                     preferred_element_type=jnp.float32) + b3
    assert y3.shape == (B3, out3)
    assert jnp.allclose(y3, y3_ref, atol=2e-2, rtol=2e-2)

    print("KERNEL_OK")
</pallas_src>

<mosaic_0001>
module attributes {stable_mosaic.version = 11 : i64} {
  func.func @_linear_kernel_small(%arg0: memref<8x32xf32, #tpu.memory_space<vmem>>, %arg1: memref<32x16xf32, #tpu.memory_space<vmem>>, %arg2: memref<1x16xf32, #tpu.memory_space<vmem>>, %arg3: memref<8x16xf32, #tpu.memory_space<vmem>>) attributes {dimension_semantics = [], scalar_prefetch = 0 : i64, scratch_operands = 0 : i64, tpu.core_type = #tpu.core_type<tc>} {
    %c0 = arith.constant 0 : index
    %c0_0 = arith.constant 0 : index
    %0 = vector.load %arg0[%c0, %c0_0] : memref<8x32xf32, #tpu.memory_space<vmem>>, vector<8x32xf32>
    %c0_1 = arith.constant 0 : index
    %c0_2 = arith.constant 0 : index
    %1 = vector.load %arg1[%c0_1, %c0_2] : memref<32x16xf32, #tpu.memory_space<vmem>>, vector<32x16xf32>
    %cst = arith.constant dense<0.000000e+00> : vector<8x16xf32>
    %2 = tpu.matmul %0, %1, %cst {dimension_numbers = #tpu.dot_dimension_numbers<[1], [0], [0], [1], [0, 0, 1, 1], [], []>} : vector<8x32xf32>, vector<32x16xf32>, vector<8x16xf32> -> vector<8x16xf32>
    %c0_3 = arith.constant 0 : index
    %c0_4 = arith.constant 0 : index
    %3 = vector.load %arg2[%c0_3, %c0_4] : memref<1x16xf32, #tpu.memory_space<vmem>>, vector<1x16xf32>
    %4 = vector.broadcast %3 : vector<1x16xf32> to vector<8x16xf32>
    %5 = arith.addf %2, %4 : vector<8x16xf32>
    %c0_5 = arith.constant 0 : index
    %c0_6 = arith.constant 0 : index
    %6 = vector.load %arg3[%c0_5, %c0_6] : memref<8x16xf32, #tpu.memory_space<vmem>>, vector<8x16xf32>
    tpu.vector_store %arg3[%c0_5, %c0_6], %5 {strides = array<i32>} : memref<8x16xf32, #tpu.memory_space<vmem>>, vector<8x16xf32>,
    return
  }
}

</mosaic_0001>

<llo_original>
// kernel: tpu_custom_call.1
$region0: #{tpu_custom_call.1}
  #allocation0 [shape = 'u32[]', space=smem, size = 0x4, offset = 0x4, fixed_abs, tag = 'smem constant byte address 0x4 - core index']
  #allocation1 [shape = 'u32[144,128]{1,0:T(1,128)}', space=vmem, size = 0x12000, scoped, tag = 'internal scratch']
  %s0 = inlined_call_operand.vmem [shape: f32[8,32], index: 0, kind: input, shape index: {}]
  %s1 = inlined_call_operand.vmem [shape: f32[32,16], index: 1, kind: input, shape index: {}]
  %s2 = inlined_call_operand.vmem [shape: f32[1,16], index: 2, kind: input, shape index: {}]
  %s3 = inlined_call_operand.hbm [shape: f32[8,16], index: 3, kind: output, shape index: {}]
  %s4 = sld [smem:[#allocation0]]
  $region22: #{tpu_custom_call.1} parent=0
    _
  %s6 = ssub.s32 1, %s4
  %s7 = scalar_select 0, %s6, %s4
  $region1: #{tpu_custom_call.1} parent=0
    #allocation2 [shape = 'u8[4096]{0}', space=vmem, size = 0x1000, scoped, tag = 'output window, operand 0, single buffered']
    #allocation3 [shape = 's32[1]{0}', space=sflag, size = 0x4, scoped, tag = 'scoped memory for tpu_custom_call.1']
    %8 = vsyncpa [#allocation3], 0
    // Predicated region
    $region2: #{tpu_custom_call.1} parent=1 // pred_check
      _
    $region3: #{tpu_custom_call.1} parent=1 // pred_check_branch
      %10 = sbr.rel (0) target = $region5
    $region4: #{tpu_custom_call.1} parent=1 // pred_region
      _
    $region5: #{tpu_custom_call.1} parent=1 // pred_fallthru
      _
    // Predicated region
    $region6: #{tpu_custom_call.1} parent=1 // pred_check
      _
    $region7: #{tpu_custom_call.1} parent=1 // pred_check_branch
      %12 = sbr.rel (0) target = $region9
    $region8: #{tpu_custom_call.1} parent=1 // pred_region
      _
    $region9: #{tpu_custom_call.1} parent=1 // pred_fallthru
      _
    // Predicated region
    $region10: #{tpu_custom_call.1} parent=1 // pred_check
      _
    $region11: #{tpu_custom_call.1} parent=1 // pred_check_branch
      %14 = sbr.rel (0) target = $region13
    $region12: #{tpu_custom_call.1} parent=1 // pred_region
      _
    $region13: #{tpu_custom_call.1} parent=1 // pred_fallthru
      _
    %v15 = vld [vmem:[%s0] sm:$0xff]
    %v16 = vld [vmem:[%s1] sm:$0xff]
    %v17 = vld [vmem:[%s1 + $0x8] sm:$0xff]
    %v18 = vld [vmem:[%s1 + $0x10] sm:$0xff]
    %v19 = vld [vmem:[%s1 + $0x18] sm:$0xff]
    %v20 = vld [vmem:[%s2] sm:$0x1]
    %v22 = vlaneseq
    %v23 = vshrl.u32 %v22, 7
    %v24 = vsub.s32 0, %v23
    %v25 = vrot.slane %v20, %v24
    %vm27 = vcmask 261120
    %v29 = vsel %vm27, %v15, 0
    %31 = vmatprep.subr.mxu0 0.0
    %32 = vmatpush1.msra.mxu0 %v16
    %33 = vmatprep.subr.mxu0 0.0
    %34 = vmatpush1.msra.mxu0 %v17
    %35 = vmatprep.subr.mxu0 0.0
    %36 = vmatpush1.msra.mxu0 %v18
    %37 = vmatprep.subr.mxu0 0.0
    %38 = vmatpush1.msra.mxu0 %v19
    %39 = vmatprep.subr.mxu0 0.0
    %40 = vmatpush1.msra.mxu0 0.0
    %41 = vmatprep.subr.mxu0 0.0
    %42 = vmatpush1.msra.mxu0 0.0
    %43 = vmatprep.subr.mxu0 0.0
    %44 = vmatpush1.msra.mxu0 0.0
    %45 = vmatprep.subr.mxu0 0.0
    %46 = vmatpush1.msra.mxu0 0.0
    %47 = vmatprep.subr.mxu0 0.0
    %48 = vmatpush1.msra.mxu0 0.0
    %49 = vmatprep.subr.mxu0 0.0
    %50 = vmatpush1.msra.mxu0 0.0
    %51 = vmatprep.subr.mxu0 0.0
    %52 = vmatpush1.msra.mxu0 0.0
    %53 = vmatprep.subr.mxu0 0.0
    %54 = vmatpush1.msra.mxu0 0.0
    %55 = vmatprep.subr.mxu0 0.0
    %56 = vmatpush1.msra.mxu0 0.0
    %57 = vmatprep.subr.mxu0 0.0
    %58 = vmatpush1.msra.mxu0 0.0
    %59 = vmatprep.subr.mxu0 0.0
    %60 = vmatpush1.msra.mxu0 0.0
    %61 = vmatprep.subr.mxu0 0.0
    %62 = vmatpush1.msra.mxu0 0.0
    %63 = vmatprep.subr.mxu0 0.0
    %64 = vmatpush1.msra.mxu0 0.0
    %65 = vmatprep.subr.mxu0 0.0
    %66 = vmatpush1.msra.mxu0 0.0
    %67 = vmatprep.subr.mxu0 0.0
    %68 = vmatpush1.msra.mxu0 0.0
    %69 = vmatprep.subr.mxu0 0.0
    %70 = vmatpush1.msra.mxu0 0.0
    %71 = vmatprep.subr.mxu0 0.0
    %72 = vmatpush1.msra.mxu0 0.0
    %73 = vmatprep.subr.mxu0 0.0
    %74 = vmatpush1.msra.mxu0 0.0
    %75 = vmatprep.subr.mxu0 0.0
    %76 = vmatpush1.msra.mxu0 0.0
    %77 = vmatprep.subr.mxu0 0.0
    %78 = vmatpush1.msra.mxu0 0.0
    %79 = vmatprep.subr.mxu0 0.0
    %80 = vmatpush1.msra.mxu0 0.0
    %81 = vmatprep.subr.mxu0 0.0
    %82 = vmatpush1.msra.mxu0 0.0
    %83 = vmatprep.subr.mxu0 0.0
    %84 = vmatpush1.msra.mxu0 0.0
    %85 = vmatprep.subr.mxu0 0.0
    %86 = vmatpush1.msra.mxu0 0.0
    %87 = vmatprep.subr.mxu0 0.0
    %88 = vmatpush1.msra.mxu0 0.0
    %89 = vmatprep.subr.mxu0 0.0
    %90 = vmatpush1.msra.mxu0 0.0
    %91 = vmatprep.subr.mxu0 0.0
    %92 = vmatpush1.msra.mxu0 0.0
    %93 = vmatprep.subr.mxu0 0.0
    %94 = vmatpush1.msra.mxu0 0.0
    %95 = vmatprep.mubr.f32.mxu0 0.0
    %96 = vmatmul.mubr.f32.gmra.mrb[0].mxu0 %v29
    %v97 = vpop.f32.mrb[0].mxu0
    %v98 = vadd.f32 %v25, %v97
    %v99 = vpop.f32.mrb[0].mxu0
    %100 = vdwg.mxu0
    %vm101 = vcmask 130048
    %102 = vst.msk [vmem:[#allocation2] sm:$0xff] %vm101, %v98
    // Predicated region
    $region14: #{tpu_custom_call.1} parent=1 // pred_check
      _
    $region15: #{tpu_custom_call.1} parent=1 // pred_check_branch
      %104 = sbr.rel (0) target = $region17
    $region16: #{tpu_custom_call.1} parent=1 // pred_region
      %s106 = ssub.s32 128, 128
      %107 = vsyncadd [#allocation3], %s106
      %s109 = sshll.u32 [#allocation2], 4
      %s110 = int_to_ptr.vmem [resolvable:$true] %s109
      %112 = dma.vmem_to_hbm [thread:$0]  %s110, 128, %s3, [#allocation3]
    $region17: #{tpu_custom_call.1} parent=1 // pred_fallthru
      _
    // Predicated region
    $region18: #{tpu_custom_call.1} parent=1 // pred_check
      _
    $region19: #{tpu_custom_call.1} parent=1 // pred_check_branch
      %114 = sbr.rel (0) target = $region21
    $region20: #{tpu_custom_call.1} parent=1 // pred_region
      %115 = dma.done [#allocation3], 128
    $region21: #{tpu_custom_call.1} parent=1 // pred_fallthru
      _
    %116 = vsyncpa [#allocation3], 1

</llo_original>
